<compile_context>
chip_gen: v7x
topology: tpu7x:2x2x1
jax: 0.10.0
libtpu: 0.0.40
codegen_flags: <defaults>
</compile_context>

<pallas_src>
import functools

import jax
import jax.numpy as jnp
from jax import lax
from jax.experimental import pallas as pl
from jax.experimental.pallas import tpu as pltpu

MARGIN = 1.25
EPS = 1e-8


def _cdiv(a: int, b: int) -> int:
    return -(-a // b)


def _round_up(a: int, b: int) -> int:
    return _cdiv(a, b) * b


def _num_tensorcores_per_chip() -> int:
    """2 TensorCores per chip on v7x; 1 on v5e/v6e (and as a safe fallback)."""
    try:
        kind = jax.devices()[0].device_kind.lower()
    except Exception:
        return 1
    return 2 if ("v7" in kind or "7x" in kind) else 1


def _contrastive_sums_kernel(x_ref, out_ref, *, n_rows, tile_n, feat_dim,
                             tiles_per_split, split_grid, needs_mask):
    # x_ref:   (tile_n, 2*D)  VMEM, input dtype (f32 or bf16) -- lane-dense.
    # out_ref: (1, 1, 2)      VMEM f32, resident accumulator per core split:
    #          [..., 0] = sum_j d_j^2 (incl. eps),  [..., 1] = sum_j relu(m-d_j)^2
    if split_grid:
        c = pl.program_id(0)           # core split  (CORE_PARALLEL)
        t = pl.program_id(1)           # row tiles   (reduction / arbitrary)
    else:
        c = 0
        t = pl.program_id(0)

    @pl.when(t == 0)
    def _init():
        out_ref[...] = jnp.zeros_like(out_ref)

    x = x_ref[...].astype(jnp.float32)                 # (tile_n, 2D), VPU upcast
    diff = x[:, :feat_dim] - x[:, feat_dim:]           # (tile_n, D)
    dsq = jnp.sum(diff * diff, axis=-1, keepdims=True) + EPS   # (tile_n, 1)
    d = jnp.sqrt(dsq)                                  # EUP
    hinge = jnp.maximum(MARGIN - d, 0.0)
    hsq = hinge * hinge

    lane = lax.broadcasted_iota(jnp.int32, (1, 1, 2), 2)

    def _accumulate(dsq_v, hsq_v):
        upd = jnp.where(lane == 0, jnp.sum(dsq_v), jnp.sum(hsq_v))  # (1,1,2)
        out_ref[...] += upd

    if not needs_mask:
        # Every tile is full: no masking code emitted at all.
        _accumulate(dsq, hsq)
    else:
        row0 = (c * tiles_per_split + t) * tile_n
        is_full = row0 + tile_n <= n_rows

        @pl.when(is_full)
        def _steady():
            _accumulate(dsq, hsq)

        @pl.when(jnp.logical_not(is_full))
        def _edge():
            # Partial last tile / clamped overflow grid point: mask rows past
            # the logical end of the batch before they touch the accumulator
            # (padded rows may contain garbage; where() discards it).
            rows = row0 + lax.broadcasted_iota(jnp.int32, (tile_n, 1), 0)
            valid = rows < n_rows
            _accumulate(jnp.where(valid, dsq, 0.0),
                        jnp.where(valid, hsq, 0.0))


def pet_contrastive_loss(features: jax.Array, labels: jax.Array,
                         distance: jax.Array | None = None,
                         *, tile_n: int | None = None,
                         block_budget_bytes: int = 4 * 1024 * 1024) -> jax.Array:
    """features: (N, 2, D) f32/bf16, labels: (N, 1) -> scalar f32 loss."""
    n, two, d = features.shape
    assert two == 2
    labels_f = labels.astype(jnp.float32)

    if distance is not None:
        # TODO(synk): precomputed-distance path stays in plain JAX (trivial
        # elementwise + mean; a kernel buys nothing here).
        dist = distance.astype(jnp.float32)
        hinge = jnp.maximum(MARGIN - dist, 0.0)
        return jnp.mean(0.5 * (labels_f * dist ** 2 + (1.0 - labels_f) * hinge ** 2))

    # Stream bf16/f32 features as-is (in-kernel upcast); anything else -> f32.
    if features.dtype not in (jnp.bfloat16, jnp.float32):
        features = features.astype(jnp.float32)
    itemsize = features.dtype.itemsize
    row_align = 16 if features.dtype == jnp.bfloat16 else 8

    two_d = 2 * d
    feats2d = features.reshape(n, two_d)        # contiguous -> free reshape

    if tile_n is None:
        padded_cols = _round_up(two_d, 128)     # lane padding in VMEM/vregs
        per_row_bytes = padded_cols * itemsize
        tile_n = max(row_align,
                     (block_budget_bytes // per_row_bytes) // row_align * row_align)
    tile_n = int(tile_n)
    tile_n = max(row_align, min(tile_n, _round_up(n, row_align)))
    tile_n = _round_up(tile_n, row_align)

    num_tiles = _cdiv(n, tile_n)

    # Only split across cores on chips that actually have 2 TensorCores (v7x);
    # on 1-TC chips (v5e / v6e) the extra axis is pure overhead.
    num_cores = _num_tensorcores_per_chip()
    num_splits = 2 if (num_cores >= 2 and num_tiles >= 2) else 1
    tiles_per_split = _cdiv(num_tiles, num_splits)
    split_grid = num_splits == 2

    # Masking is only needed if a tile can be partial or the split creates
    # overflow (clamped, fully-masked) grid points.
    needs_mask = (n % tile_n != 0) or (num_splits * tiles_per_split != num_tiles)

    kernel = functools.partial(
        _contrastive_sums_kernel,
        n_rows=n, tile_n=tile_n, feat_dim=d,
        tiles_per_split=tiles_per_split,
        split_grid=split_grid, needs_mask=needs_mask,
    )

    if split_grid:
        grid = (num_splits, tiles_per_split)
        in_specs = [pl.BlockSpec(
            (tile_n, two_d),
            # Clamp overflow grid points to the last real block; their rows
            # are masked in-kernel so they contribute nothing.
            lambda c, t: (jnp.minimum(c * tiles_per_split + t, num_tiles - 1), 0))]
        out_specs = pl.BlockSpec((1, 1, 2), lambda c, t: (c, 0, 0))
        dim_sem = (pltpu.CORE_PARALLEL, pltpu.ARBITRARY)
    else:
        grid = (num_tiles,)
        in_specs = [pl.BlockSpec((tile_n, two_d), lambda t: (t, 0))]
        out_specs = pl.BlockSpec((1, 1, 2), lambda t: (0, 0, 0))
        dim_sem = ("arbitrary",)

    partials = pl.pallas_call(
        kernel,
        out_shape=jax.ShapeDtypeStruct((num_splits, 1, 2), jnp.float32),
        grid=grid,
        in_specs=in_specs,
        out_specs=out_specs,
        compiler_params=pltpu.CompilerParams(
            dimension_semantics=dim_sem,
            vmem_limit_bytes=32 * 1024 * 1024,
        ),
    )(feats2d)

    sum_same = jnp.sum(partials[:, :, 0])       # sum_j d_j^2 (incl. eps)
    sum_diff = jnp.sum(partials[:, :, 1])       # sum_j relu(margin - d_j)^2
    sum_labels = jnp.sum(labels_f)              # sum_i Y_i
    n_f = jnp.float32(n)
    return 0.5 * (sum_labels * sum_same + (n_f - sum_labels) * sum_diff) / (n_f * n_f)


def _reference_loss(features, labels):
    # Pure-JAX reference mirroring the PyTorch broadcast semantics exactly.
    f = features.astype(jnp.float32)
    f1 = f[:, 0, :]
    f2 = f[:, 1, :]
    d = jnp.sqrt(jnp.sum((f1 - f2) ** 2, axis=1) + EPS)             # (N,)
    hinge = jnp.maximum(MARGIN - d, 0.0)
    diff_pet = (1.0 - labels) * hinge ** 2                          # (N, N)
    same_pet = labels * d ** 2                                      # (N, N)
    return jnp.mean(0.5 * (same_pet + diff_pet))


if __name__ == "__main__":
    key = jax.random.PRNGKey(0)
    k1, k2, k3, k4, k5, k6 = jax.random.split(key, 6)

    # Case 1: small tile-aligned batch, default tile, f32.
    N, D = 8, 32
    features = jax.random.normal(k1, (N, 2, D), dtype=jnp.float32)
    labels = jax.random.bernoulli(k2, 0.5, (N, 1)).astype(jnp.float32)
    loss = pet_contrastive_loss(features, labels)
    jax.block_until_ready(loss)
    ref = _reference_loss(features, labels)
    assert jnp.allclose(loss, ref, rtol=1e-5, atol=1e-6), (loss, ref)

    # Case 2: multiple tiles with a partial (masked) last tile, f32.
    N2, D2 = 40, 32
    features2 = jax.random.normal(k3, (N2, 2, D2), dtype=jnp.float32)
    labels2 = jax.random.bernoulli(k4, 0.5, (N2, 1)).astype(jnp.float32)
    loss2 = pet_contrastive_loss(features2, labels2, tile_n=16)
    jax.block_until_ready(loss2)
    ref2 = _reference_loss(features2, labels2)
    assert jnp.allclose(loss2, ref2, rtol=1e-5, atol=1e-6), (loss2, ref2)

    # Case 3: bf16 features streamed directly (in-kernel f32 upcast), 3 tiles.
    N3, D3 = 48, 32
    features3 = jax.random.normal(k5, (N3, 2, D3), dtype=jnp.float32).astype(jnp.bfloat16)
    labels3 = jax.random.bernoulli(k6, 0.5, (N3, 1)).astype(jnp.float32)
    loss3 = pet_contrastive_loss(features3, labels3, tile_n=16)
    jax.block_until_ready(loss3)
    ref3 = _reference_loss(features3, labels3)
    assert jnp.allclose(loss3, ref3, rtol=1e-5, atol=1e-6), (loss3, ref3)

    print("KERNEL_OK")
</pallas_src>

<mosaic_0001>
module attributes {stable_mosaic.version = 11 : i64} {
  func.func @_contrastive_sums_kernel(%arg0: i32, %arg1: memref<8x64xf32, #tpu.memory_space<vmem>>, %arg2: memref<1x1x2xf32, #tpu.memory_space<vmem>>) attributes {dimension_semantics = [#tpu.dimension_semantics<arbitrary>], iteration_bounds = array<i64: 1>, scalar_prefetch = 0 : i64, scratch_operands = 0 : i64, tpu.core_type = #tpu.core_type<tc>, window_params = [{transform_indices = @transform_0, window_bounds = array<i64: 8, 64>}, {pipeline_mode = #tpu.pipeline_mode<synchronous>, transform_indices = @transform_1, window_bounds = array<i64: 1, 1, 2>}]} {
    %c0_i32 = arith.constant 0 : i32
    %0 = arith.cmpi eq, %arg0, %c0_i32 : i32
    %1 = arith.extui %0 : i1 to i32
    %c0_i32_0 = arith.constant 0 : i32
    %2 = arith.cmpi ne, %1, %c0_i32_0 : i32
    scf.if %2 {
      %cst_14 = arith.constant 0.000000e+00 : f32
      %35 = vector.broadcast %cst_14 : f32 to vector<1x1x2xf32>
      %c0_15 = arith.constant 0 : index
      %c0_16 = arith.constant 0 : index
      %c0_17 = arith.constant 0 : index
      %36 = vector.load %arg2[%c0_15, %c0_16, %c0_17] : memref<1x1x2xf32, #tpu.memory_space<vmem>>, vector<1x1x2xf32>
      tpu.vector_store %arg2[%c0_15, %c0_16, %c0_17], %35 {strides = array<i32>} : memref<1x1x2xf32, #tpu.memory_space<vmem>>, vector<1x1x2xf32>,
    } else {
    }
    %c0 = arith.constant 0 : index
    %c0_1 = arith.constant 0 : index
    %3 = vector.load %arg1[%c0, %c0_1] : memref<8x64xf32, #tpu.memory_space<vmem>>, vector<8x64xf32>
    %4 = vector.extract_strided_slice %3 {offsets = [0, 0], sizes = [8, 32], strides = [1, 1]} : vector<8x64xf32> to vector<8x32xf32>
    %5 = vector.extract_strided_slice %3 {offsets = [0, 32], sizes = [8, 32], strides = [1, 1]} : vector<8x64xf32> to vector<8x32xf32>
    %6 = arith.subf %4, %5 : vector<8x32xf32>
    %7 = arith.mulf %6, %6 : vector<8x32xf32>
    %cst = arith.constant dense<0.000000e+00> : vector<8xf32>
    %8 = vector.multi_reduction <add>, %7, %cst [1] : vector<8x32xf32> to vector<8xf32>
    %9 = vector.shape_cast %8 : vector<8xf32> to vector<8x1xf32>
    %cst_2 = arith.constant 9.99999993E-9 : f32
    %10 = vector.broadcast %cst_2 : f32 to vector<8x1xf32>
    %11 = arith.addf %9, %10 : vector<8x1xf32>
    %12 = math.sqrt %11 : vector<8x1xf32>
    %cst_3 = arith.constant 1.250000e+00 : f32
    %13 = vector.broadcast %cst_3 : f32 to vector<8x1xf32>
    %14 = arith.subf %13, %12 : vector<8x1xf32>
    %cst_4 = arith.constant 0.000000e+00 : f32
    %15 = vector.broadcast %cst_4 : f32 to vector<8x1xf32>
    %16 = arith.maximumf %14, %15 : vector<8x1xf32>
    %17 = arith.mulf %16, %16 : vector<8x1xf32>
    %18 = tpu.iota {dimensions = array<i32: 2>} : vector<1x1x2xi32>
    %c0_i32_5 = arith.constant 0 : i32
    %19 = vector.broadcast %c0_i32_5 : i32 to vector<1x1x2xi32>
    %20 = arith.cmpi eq, %18, %19 : vector<1x1x2xi32>
    %21 = vector.shape_cast %11 : vector<8x1xf32> to vector<1x8x1xf32>
    %cst_6 = arith.constant dense<0.000000e+00> : vector<1xf32>
    %22 = vector.multi_reduction <add>, %21, %cst_6 [1, 2] : vector<1x8x1xf32> to vector<1xf32>
    %23 = vector.shape_cast %22 : vector<1xf32> to vector<1x1x1xf32>
    %24 = vector.extract %23[0, 0, 0] : f32 from vector<1x1x1xf32>
    %25 = vector.shape_cast %17 : vector<8x1xf32> to vector<1x8x1xf32>
    %cst_7 = arith.constant dense<0.000000e+00> : vector<1xf32>
    %26 = vector.multi_reduction <add>, %25, %cst_7 [1, 2] : vector<1x8x1xf32> to vector<1xf32>
    %27 = vector.shape_cast %26 : vector<1xf32> to vector<1x1x1xf32>
    %28 = vector.extract %27[0, 0, 0] : f32 from vector<1x1x1xf32>
    %29 = vector.broadcast %24 : f32 to vector<1x1x2xf32>
    %30 = vector.broadcast %28 : f32 to vector<1x1x2xf32>
    %31 = arith.select %20, %29, %30 : vector<1x1x2xi1>, vector<1x1x2xf32>
    %c0_8 = arith.constant 0 : index
    %c0_9 = arith.constant 0 : index
    %c0_10 = arith.constant 0 : index
    %32 = vector.load %arg2[%c0_8, %c0_9, %c0_10] : memref<1x1x2xf32, #tpu.memory_space<vmem>>, vector<1x1x2xf32>
    %33 = arith.addf %32, %31 : vector<1x1x2xf32>
    %c0_11 = arith.constant 0 : index
    %c0_12 = arith.constant 0 : index
    %c0_13 = arith.constant 0 : index
    %34 = vector.load %arg2[%c0_11, %c0_12, %c0_13] : memref<1x1x2xf32, #tpu.memory_space<vmem>>, vector<1x1x2xf32>
    tpu.vector_store %arg2[%c0_11, %c0_12, %c0_13], %33 {strides = array<i32>} : memref<1x1x2xf32, #tpu.memory_space<vmem>>, vector<1x1x2xf32>,
    return
  }
  func.func @transform_0(%arg0: i32) -> (i32, i32) {
    %c0_i32 = arith.constant 0 : i32
    %c0_i32_0 = arith.constant 0 : i32
    return %arg0, %c0_i32 : i32, i32
  }
  func.func @transform_1(%arg0: i32) -> (i32, i32, i32) {
    %c0_i32 = arith.constant 0 : i32
    %c0_i32_0 = arith.constant 0 : i32
    %c0_i32_1 = arith.constant 0 : i32
    %c0_i32_2 = arith.constant 0 : i32
    return %c0_i32, %c0_i32_0, %c0_i32_1 : i32, i32, i32
  }
}

</mosaic_0001>

<llo_original>
// kernel: tpu_custom_call.1
$region0: #{tpu_custom_call.1}
  #allocation0 [shape = 'u32[]', space=smem, size = 0x4, offset = 0x4, fixed_abs, tag = 'smem constant byte address 0x4 - core index']
  #allocation1 [shape = 'u32[144,128]{1,0:T(1,128)}', space=vmem, size = 0x12000, scoped, tag = 'internal scratch']
  %s0 = inlined_call_operand.hbm [shape: f32[8,64], index: 0, kind: input, shape index: {}]
  %s1 = inlined_call_operand.hbm [shape: f32[1,1,2], index: 1, kind: output, shape index: {}]
  %s2 = sld [smem:[#allocation0]]
  $region22: #{tpu_custom_call.1} parent=0
    _
  %s4 = ssub.s32 1, %s2
  %s5 = scalar_select 0, %s4, %s2
  $region1: #{tpu_custom_call.1} parent=0
    #allocation2 [shape = 'u8[4096]{0}', space=vmem, size = 0x1000, scoped, tag = 'input window, operand 0, single buffered']
    #allocation3 [shape = 's32[1]{0}', space=sflag, size = 0x4, scoped, tag = 'scoped memory for tpu_custom_call.1']
    #allocation4 [shape = 's32[1]{0}', space=sflag, size = 0x4, scoped, tag = 'scoped memory for tpu_custom_call.1']
    #allocation5 [shape = 'u8[512]{0}', space=vmem, size = 0x400, scoped, tag = 'output window, operand 0, single buffered']
    %6 = vsyncpa [#allocation3], 0
    %7 = vsyncpa [#allocation4], 0
    // Predicated region
    $region2: #{tpu_custom_call.1} parent=1 // pred_check
      _
    $region3: #{tpu_custom_call.1} parent=1 // pred_check_branch
      %9 = sbr.rel (0) target = $region5
    $region4: #{tpu_custom_call.1} parent=1 // pred_region
      %s11 = ssub.s32 128, 128
      %12 = vsyncadd [#allocation3], %s11
      %s14 = sshll.u32 [#allocation2], 4
      %s15 = int_to_ptr.vmem [resolvable:$true] %s14
      %17 = dma.hbm_to_vmem [thread:$0]  %s0, 128, %s15, [#allocation3]
    $region5: #{tpu_custom_call.1} parent=1 // pred_fallthru
      _
    // Predicated region
    $region6: #{tpu_custom_call.1} parent=1 // pred_check
      _
    $region7: #{tpu_custom_call.1} parent=1 // pred_check_branch
      %19 = sbr.rel (0) target = $region9
    $region8: #{tpu_custom_call.1} parent=1 // pred_region
      %20 = dma.done [#allocation3], 128
    $region9: #{tpu_custom_call.1} parent=1 // pred_fallthru
      _
    %p21 = scmp.eq.s32.totalorder 0, 0
    // Predicated region
    $region10: #{tpu_custom_call.1} parent=1 // pred_check
      %p22 = pneg %p21
    $region11: #{tpu_custom_call.1} parent=1 // pred_check_branch
      %24 = sbr.rel (%p22) target = $region13
    $region12: #{tpu_custom_call.1} parent=1 // pred_region
      %vm25 = vcmask 8192
      %26 = vst.msk [vmem:[#allocation5] sm:$0x1] %vm25, 0.0
    $region13: #{tpu_custom_call.1} parent=1 // pred_fallthru
      _
    %v27 = vld [vmem:[#allocation2] sm:$0xff]
    %29 = vrot.lane.b32.xlu0 %v27, 96
    %v30 = vpop.permute.xlu0 %29
    %v32 = vsub.f32 %v27, %v30
    %v33 = vmul.f32 %v32, %v32
    %vm34 = vcmask 261120
    %v35 = vsel %vm34, %v33, 0.0
    %36 = vadd.xlane.f32.xlu0 %v35
    %v37 = vpop.xlane.xlu0 %36
    %v38 = vadd.f32 %v37, 1e-08
    %v39 = vrsqrt.pop %v38
    %v40 = vmul.f32 %v38, %v39
    %vm41 = vcmp.eq.f32.partialorder %v38, inf
    %v42 = vsel %vm41, %v38, %v40
    %vm43 = vcmp.eq.f32.partialorder %v38, 0.0
    %v44 = vand.u32 %v38, 2147483648
    %v45 = vsel %vm43, %v44, %v42
    %v46 = vsub.f32 1.25, %v45
    %v47 = vmax.f32 %v46, 0.0
    %v48 = vmul.f32 %v47, %v47
    %v49 = vlaneseq
    %v50 = vand.u32 %v49, 127
    %vm51 = vcmp.eq.s32.totalorder %v50, 0
    %vm52 = vcmask 7168
    %v53 = vsel %vm52, %v38, 0.0
    %54 = vadd.xlane.f32.xlu0 %v53
    %v55 = vpop.xlane.xlu0 %54
    %v56 = vrot.slane %v55, 4
    %v57 = vadd.f32 %v55, %v56
    %v58 = vrot.slane %v57, 2
    %v59 = vadd.f32 %v57, %v58
    %v60 = vrot.slane %v59, 1
    %v61 = vadd.f32 %v59, %v60
    %s62 = vtos %v61
    %v63 = vsel %vm52, %v48, 0.0
    %64 = vadd.xlane.f32.xlu0 %v63
    %v65 = vpop.xlane.xlu0 %64
    %v66 = vrot.slane %v65, 4
    %v67 = vadd.f32 %v65, %v66
    %v68 = vrot.slane %v67, 2
    %v69 = vadd.f32 %v67, %v68
    %v70 = vrot.slane %v69, 1
    %v71 = vadd.f32 %v69, %v70
    %s72 = vtos %v71
    %v73 = vstv %s62
    %v74 = vstv %s72
    %v75 = vsel %vm51, %v73, %v74
    %v76 = vld [vmem:[#allocation5] sm:$0x1]
    %v77 = vadd.f32 %v76, %v75
    %vm78 = vcmask 8192
    %79 = vst.msk [vmem:[#allocation5] sm:$0x1] %vm78, %v77
    // Predicated region
    $region14: #{tpu_custom_call.1} parent=1 // pred_check
      _
    $region15: #{tpu_custom_call.1} parent=1 // pred_check_branch
      %81 = sbr.rel (0) target = $region17
    $region16: #{tpu_custom_call.1} parent=1 // pred_region
      %s83 = ssub.s32 16, 16
      %84 = vsyncadd [#allocation4], %s83
      %s86 = sshll.u32 [#allocation5], 4
      %s87 = int_to_ptr.vmem [resolvable:$true] %s86
      %89 = dma.vmem_to_hbm [thread:$0]  %s87, 16, %s1, [#allocation4]
    $region17: #{tpu_custom_call.1} parent=1 // pred_fallthru
      _
    // Predicated region
    $region18: #{tpu_custom_call.1} parent=1 // pred_check
      _
    $region19: #{tpu_custom_call.1} parent=1 // pred_check_branch
      %91 = sbr.rel (0) target = $region21
    $region20: #{tpu_custom_call.1} parent=1 // pred_region
      %92 = dma.done [#allocation4], 16
    $region21: #{tpu_custom_call.1} parent=1 // pred_fallthru
      _
    %93 = vsyncpa [#allocation3], 1
    %94 = vsyncpa [#allocation4], 1

</llo_original>
